<compile_context>
chip_gen: v7x
topology: tpu7x:2x2x1
jax: 0.10.0
libtpu: 0.0.40
codegen_flags: <defaults>
</compile_context>

<pallas_src>
import jax
import jax.numpy as jnp
from jax.experimental import pallas as pl
from jax.experimental.pallas import tpu as pltpu


def _round_up(v: int, m: int) -> int:
    return (v + m - 1) // m * m


def _cdiv(a: int, b: int) -> int:
    return (a + b - 1) // b


def _pad_to(a: jax.Array, shape) -> jax.Array:
    pads = [(0, t - s) for s, t in zip(a.shape, shape)]
    if any(p[1] for p in pads):
        a = jnp.pad(a, pads)
    return a


def _sublane_align(*dtypes) -> int:
    # f32 -> 8 rows, bf16 -> 16, int8/fp8 -> 32 (sub-32-bit packs along sublanes).
    return max(32 // jnp.dtype(d).itemsize for d in dtypes)


# --------------------- single-block kernel (small shapes) ---------------------
def _matmul_single_block_kernel(x_ref, y_ref, o_ref):
    # One MXU pass over the whole (VMEM-resident) operands, f32 accumulation.
    o_ref[...] = jnp.dot(
        x_ref[...], y_ref[...], preferred_element_type=jnp.float32
    ).astype(o_ref.dtype)


def _matmul_small(xp, yp, out_dtype):
    Mp, _ = xp.shape
    _, Np = yp.shape
    return pl.pallas_call(
        _matmul_single_block_kernel,
        out_shape=jax.ShapeDtypeStruct((Mp, Np), out_dtype),
        # No grid, no index_maps: whole arrays live in VMEM, zero pipeline
        # bookkeeping, no needless double buffering.
        in_specs=[
            pl.BlockSpec(memory_space=pltpu.MemorySpace.VMEM),
            pl.BlockSpec(memory_space=pltpu.MemorySpace.VMEM),
        ],
        out_specs=pl.BlockSpec(memory_space=pltpu.MemorySpace.VMEM),
    )(xp, yp)


# ------------------------- tiled kernels (large shapes) ------------------------
def _matmul_tiled_kernel_f32out(x_ref, y_ref, o_ref):
    # f32 output: accumulate directly into the output block, which is resident
    # in VMEM across the K axis (its index_map ignores k).  Saves tm*tn*4 bytes
    # of scratch and the final acc->out copy.
    @pl.when(pl.program_id(2) == 0)
    def _():
        o_ref[...] = jnp.zeros_like(o_ref)

    o_ref[...] += jnp.dot(
        x_ref[...], y_ref[...], preferred_element_type=jnp.float32
    )


def _matmul_tiled_kernel_acc(x_ref, y_ref, o_ref, acc_ref):
    # Narrow output dtypes: accumulate in an f32 scratch, write once on last k.
    @pl.when(pl.program_id(2) == 0)
    def _():
        acc_ref[...] = jnp.zeros_like(acc_ref)

    acc_ref[...] += jnp.dot(
        x_ref[...], y_ref[...], preferred_element_type=jnp.float32
    )

    @pl.when(pl.program_id(2) == pl.num_programs(2) - 1)
    def _():
        o_ref[...] = acc_ref[...].astype(o_ref.dtype)


def _matmul_tiled(xp, yp, out_dtype, tm, tn, tk, vmem_limit_bytes):
    Mp, Kp = xp.shape
    _, Np = yp.shape
    grid = (Mp // tm, Np // tn, Kp // tk)

    f32_out = jnp.dtype(out_dtype) == jnp.dtype(jnp.float32)
    kernel = _matmul_tiled_kernel_f32out if f32_out else _matmul_tiled_kernel_acc
    scratch = [] if f32_out else [pltpu.VMEM((tm, tn), jnp.float32)]

    cost = pl.CostEstimate(
        flops=2 * Mp * Np * Kp,
        bytes_accessed=(
            Mp * Kp * jnp.dtype(xp.dtype).itemsize * (Np // tn)
            + Kp * Np * jnp.dtype(yp.dtype).itemsize * (Mp // tm)
            + Mp * Np * jnp.dtype(out_dtype).itemsize
        ),
        transcendentals=0,
    )

    return pl.pallas_call(
        kernel,
        out_shape=jax.ShapeDtypeStruct((Mp, Np), out_dtype),
        grid_spec=pltpu.PrefetchScalarGridSpec(
            num_scalar_prefetch=0,
            grid=grid,
            in_specs=[
                pl.BlockSpec((tm, tk), lambda i, j, k: (i, k)),
                pl.BlockSpec((tk, tn), lambda i, j, k: (k, j)),
            ],
            out_specs=pl.BlockSpec((tm, tn), lambda i, j, k: (i, j)),
            scratch_shapes=scratch,
        ),
        compiler_params=pltpu.CompilerParams(
            dimension_semantics=("parallel", "parallel", "arbitrary"),
            vmem_limit_bytes=vmem_limit_bytes,
        ),
        cost_estimate=cost,
    )(xp, yp)


# ----------------------------- tile selection ---------------------------------
_TM_MAX, _TN_MAX, _TK_MAX = 1024, 1024, 512       # f32 worst case ~20 MiB of VMEM
_TILE_VMEM_BUDGET = 40 * 1024 * 1024              # safe on v7x (64 MiB physical)
_SMALL_VMEM_BUDGET_BYTES = 2 * 1024 * 1024        # no-grid single-block threshold


def _pick_tiles(M0, K0, N0, m_align, x_bytes, y_bytes, out_bytes, use_scratch):
    """Pick (tm, tn, tk) minimizing round-up padding, respecting VMEM budget and
    keeping >= 2 parallel output tiles for v7x's two TensorCores."""

    def pick(dim, tmax, align):
        n = max(1, _cdiv(dim, tmax))
        t = _round_up(_cdiv(dim, n), align)
        return n, t

    n_m, tm = pick(M0, _TM_MAX, m_align)
    n_n, tn = pick(N0, _TN_MAX, 128)
    n_k, tk = pick(K0, _TK_MAX, 128)

    # Megacore: guarantee at least 2 tiles along the parallel (i, j) axes.
    if n_m * n_n < 2:
        if N0 >= 2 * 128:
            n_n, tn = 2, _round_up(_cdiv(N0, 2), 128)
        elif M0 >= 2 * m_align:
            n_m, tm = 2, _round_up(_cdiv(M0, 2), m_align)

    def footprint(a, b, c):
        f = 2 * a * c * x_bytes + 2 * c * b * y_bytes + 2 * a * b * out_bytes
        if use_scratch:
            f += a * b * 4
        return f

    # Shrink (rarely needed with the maxima above) to stay within the
    # generation-safe budget.
    while footprint(tm, tn, tk) > _TILE_VMEM_BUDGET:
        if tk > 128:
            n_k, tk = pick(K0, max(128, _round_up(tk // 2, 128)), 128)
        elif tn > 128:
            n_n, tn = pick(N0, max(128, _round_up(tn // 2, 128)), 128)
        elif tm > m_align:
            n_m, tm = pick(M0, max(m_align, _round_up(tm // 2, m_align)), m_align)
        else:
            break

    return (tm, tn, tk), (n_m * tm, n_n * tn, n_k * tk), footprint(tm, tn, tk)


# ---------------------------------- dispatch ----------------------------------
@jax.jit
def matmul(x: jax.Array, y: jax.Array) -> jax.Array:
    """Pallas equivalent of MatmulModule.forward(x, y) = x @ y for 2-D inputs."""
    assert x.ndim == 2 and y.ndim == 2, "this kernel implements 2-D matmul"
    M, K = x.shape
    K2, N = y.shape
    assert K == K2, f"inner dims must match, got {K} vs {K2}"
    assert jnp.issubdtype(x.dtype, jnp.floating) and jnp.issubdtype(y.dtype, jnp.floating), (
        "integer matmul is not supported by this kernel (f32 accumulation / "
        "float MXU path); cast inputs to a float dtype"
    )
    out_dtype = jnp.result_type(x.dtype, y.dtype)

    x_bytes = jnp.dtype(x.dtype).itemsize
    y_bytes = jnp.dtype(y.dtype).itemsize
    out_bytes = jnp.dtype(out_dtype).itemsize

    # Lane/sublane alignment (zero padding is matmul-neutral). M is a sublane
    # dim for x and out, so respect the packed-tile height of their dtypes.
    m_align = _sublane_align(x.dtype, out_dtype)
    M0 = _round_up(M, m_align)
    K0 = _round_up(K, 128)
    N0 = _round_up(N, 128)

    small_footprint = M0 * K0 * x_bytes + K0 * N0 * y_bytes + M0 * N0 * out_bytes

    if small_footprint <= _SMALL_VMEM_BUDGET_BYTES:
        xp = _pad_to(x, (M0, K0))
        yp = _pad_to(y, (K0, N0))
        out_p = _matmul_small(xp, yp, out_dtype)
    else:
        use_scratch = jnp.dtype(out_dtype) != jnp.dtype(jnp.float32)
        (tm, tn, tk), (Mp, Np, Kp), fp = _pick_tiles(
            M0, K0, N0, m_align, x_bytes, y_bytes, out_bytes, use_scratch
        )
        xp = _pad_to(x, (Mp, Kp))
        yp = _pad_to(y, (Kp, Np))
        # Explicit scoped-VMEM limit: actual footprint + headroom, never below
        # the 32 MiB default, capped well under v7x's 64 MiB physical VMEM.
        vmem_limit = min(max(fp + (8 << 20), 32 << 20), 56 << 20)
        out_p = _matmul_tiled(xp, yp, out_dtype, tm, tn, tk, vmem_limit)

    return out_p[:M, :N]


if __name__ == "__main__":
    key = jax.random.PRNGKey(0)
    kx, ky = jax.random.split(key)

    # Shapes from MatmulModule.get_random_inputs(): (5, 100) @ (100, 5).
    x = jax.random.normal(kx, (5, 100), dtype=jnp.float32)
    y = jax.random.normal(ky, (100, 5), dtype=jnp.float32)

    out = matmul(x, y)
    jax.block_until_ready(out)
    ref = x @ y
    assert out.shape == (5, 5)
    assert jnp.allclose(out, ref, atol=1e-4, rtol=1e-4), "small-path mismatch vs reference"

    # Also exercise the tiled (large-shape) path once for correctness
    # (exercises the megacore split: grid (1, 2, 2) and direct f32 o_ref accum).
    kx2, ky2 = jax.random.split(ky)
    xl = jax.random.normal(kx2, (512, 1024), dtype=jnp.float32)
    yl = jax.random.normal(ky2, (1024, 512), dtype=jnp.float32)
    out_l = matmul(xl, yl)
    jax.block_until_ready(out_l)
    ref_l = xl @ yl
    assert out_l.shape == (512, 512)
    assert jnp.allclose(out_l, ref_l, atol=1e-3, rtol=1e-3), "tiled-path mismatch vs reference"

    print("KERNEL_OK")
</pallas_src>

<mosaic_0001>
module attributes {stable_mosaic.version = 11 : i64} {
  func.func @_matmul_single_block_kernel(%arg0: memref<8x128xf32, #tpu.memory_space<vmem>>, %arg1: memref<128x128xf32, #tpu.memory_space<vmem>>, %arg2: memref<8x128xf32, #tpu.memory_space<vmem>>) attributes {dimension_semantics = [], scalar_prefetch = 0 : i64, scratch_operands = 0 : i64, tpu.core_type = #tpu.core_type<tc>} {
    %c0 = arith.constant 0 : index
    %c0_0 = arith.constant 0 : index
    %0 = vector.load %arg0[%c0, %c0_0] : memref<8x128xf32, #tpu.memory_space<vmem>>, vector<8x128xf32>
    %c0_1 = arith.constant 0 : index
    %c0_2 = arith.constant 0 : index
    %1 = vector.load %arg1[%c0_1, %c0_2] : memref<128x128xf32, #tpu.memory_space<vmem>>, vector<128x128xf32>
    %cst = arith.constant dense<0.000000e+00> : vector<8x128xf32>
    %2 = tpu.matmul %0, %1, %cst {dimension_numbers = #tpu.dot_dimension_numbers<[1], [0], [0], [1], [0, 0, 1, 1], [], []>} : vector<8x128xf32>, vector<128x128xf32>, vector<8x128xf32> -> vector<8x128xf32>
    %c0_3 = arith.constant 0 : index
    %c0_4 = arith.constant 0 : index
    %3 = vector.load %arg2[%c0_3, %c0_4] : memref<8x128xf32, #tpu.memory_space<vmem>>, vector<8x128xf32>
    tpu.vector_store %arg2[%c0_3, %c0_4], %2 {strides = array<i32>} : memref<8x128xf32, #tpu.memory_space<vmem>>, vector<8x128xf32>,
    return
  }
}

</mosaic_0001>

<llo_original>
// kernel: matmul.1
$region0: #{matmul.1}
  #allocation0 [shape = 'u32[]', space=smem, size = 0x4, offset = 0x4, fixed_abs, tag = 'smem constant byte address 0x4 - core index']
  #allocation1 [shape = 'u32[144,128]{1,0:T(1,128)}', space=vmem, size = 0x12000, scoped, tag = 'internal scratch']
  %s0 = inlined_call_operand.vmem [shape: f32[8,128], index: 0, kind: input, shape index: {}]
  %s1 = inlined_call_operand.vmem [shape: f32[128,128], index: 1, kind: input, shape index: {}]
  %s2 = inlined_call_operand.hbm [shape: f32[8,128], index: 2, kind: output, shape index: {}]
  %s3 = sld [smem:[#allocation0]]
  $region18: #{matmul.1} parent=0
    _
  %s5 = ssub.s32 1, %s3
  %s6 = scalar_select 0, %s5, %s3
  $region1: #{matmul.1} parent=0
    #allocation2 [shape = 'u8[4096]{0}', space=vmem, size = 0x1000, scoped, tag = 'output window, operand 0, single buffered']
    #allocation3 [shape = 's32[1]{0}', space=sflag, size = 0x4, scoped, tag = 'scoped memory for matmul.1']
    %7 = vsyncpa [#allocation3], 0
    // Predicated region
    $region2: #{matmul.1} parent=1 // pred_check
      _
    $region3: #{matmul.1} parent=1 // pred_check_branch
      %9 = sbr.rel (0) target = $region5
    $region4: #{matmul.1} parent=1 // pred_region
      _
    $region5: #{matmul.1} parent=1 // pred_fallthru
      _
    // Predicated region
    $region6: #{matmul.1} parent=1 // pred_check
      _
    $region7: #{matmul.1} parent=1 // pred_check_branch
      %11 = sbr.rel (0) target = $region9
    $region8: #{matmul.1} parent=1 // pred_region
      _
    $region9: #{matmul.1} parent=1 // pred_fallthru
      _
    %v12 = vld [vmem:[%s0] sm:$0xff]
    %v13 = vld [vmem:[%s1] sm:$0xff]
    %v14 = vld [vmem:[%s1 + $0x8] sm:$0xff]
    %v15 = vld [vmem:[%s1 + $0x10] sm:$0xff]
    %v16 = vld [vmem:[%s1 + $0x18] sm:$0xff]
    %v17 = vld [vmem:[%s1 + $0x20] sm:$0xff]
    %v18 = vld [vmem:[%s1 + $0x28] sm:$0xff]
    %v19 = vld [vmem:[%s1 + $0x30] sm:$0xff]
    %v20 = vld [vmem:[%s1 + $0x38] sm:$0xff]
    %v21 = vld [vmem:[%s1 + $0x40] sm:$0xff]
    %v22 = vld [vmem:[%s1 + $0x48] sm:$0xff]
    %v23 = vld [vmem:[%s1 + $0x50] sm:$0xff]
    %v24 = vld [vmem:[%s1 + $0x58] sm:$0xff]
    %v25 = vld [vmem:[%s1 + $0x60] sm:$0xff]
    %v26 = vld [vmem:[%s1 + $0x68] sm:$0xff]
    %v27 = vld [vmem:[%s1 + $0x70] sm:$0xff]
    %v28 = vld [vmem:[%s1 + $0x78] sm:$0xff]
    %29 = vmatprep.subr.mxu0 0.0
    %30 = vmatpush1.msra.mxu0 %v13
    %31 = vmatprep.subr.mxu0 0.0
    %32 = vmatpush1.msra.mxu0 %v14
    %33 = vmatprep.subr.mxu0 0.0
    %34 = vmatpush1.msra.mxu0 %v15
    %35 = vmatprep.subr.mxu0 0.0
    %36 = vmatpush1.msra.mxu0 %v16
    %37 = vmatprep.subr.mxu0 0.0
    %38 = vmatpush1.msra.mxu0 %v17
    %39 = vmatprep.subr.mxu0 0.0
    %40 = vmatpush1.msra.mxu0 %v18
    %41 = vmatprep.subr.mxu0 0.0
    %42 = vmatpush1.msra.mxu0 %v19
    %43 = vmatprep.subr.mxu0 0.0
    %44 = vmatpush1.msra.mxu0 %v20
    %45 = vmatprep.subr.mxu0 0.0
    %46 = vmatpush1.msra.mxu0 %v21
    %47 = vmatprep.subr.mxu0 0.0
    %48 = vmatpush1.msra.mxu0 %v22
    %49 = vmatprep.subr.mxu0 0.0
    %50 = vmatpush1.msra.mxu0 %v23
    %51 = vmatprep.subr.mxu0 0.0
    %52 = vmatpush1.msra.mxu0 %v24
    %53 = vmatprep.subr.mxu0 0.0
    %54 = vmatpush1.msra.mxu0 %v25
    %55 = vmatprep.subr.mxu0 0.0
    %56 = vmatpush1.msra.mxu0 %v26
    %57 = vmatprep.subr.mxu0 0.0
    %58 = vmatpush1.msra.mxu0 %v27
    %59 = vmatprep.subr.mxu0 0.0
    %60 = vmatpush1.msra.mxu0 %v28
    %61 = vmatprep.subr.mxu0 0.0
    %62 = vmatpush1.msra.mxu0 0.0
    %63 = vmatprep.subr.mxu0 0.0
    %64 = vmatpush1.msra.mxu0 0.0
    %65 = vmatprep.subr.mxu0 0.0
    %66 = vmatpush1.msra.mxu0 0.0
    %67 = vmatprep.subr.mxu0 0.0
    %68 = vmatpush1.msra.mxu0 0.0
    %69 = vmatprep.subr.mxu0 0.0
    %70 = vmatpush1.msra.mxu0 0.0
    %71 = vmatprep.subr.mxu0 0.0
    %72 = vmatpush1.msra.mxu0 0.0
    %73 = vmatprep.subr.mxu0 0.0
    %74 = vmatpush1.msra.mxu0 0.0
    %75 = vmatprep.subr.mxu0 0.0
    %76 = vmatpush1.msra.mxu0 0.0
    %77 = vmatprep.subr.mxu0 0.0
    %78 = vmatpush1.msra.mxu0 0.0
    %79 = vmatprep.subr.mxu0 0.0
    %80 = vmatpush1.msra.mxu0 0.0
    %81 = vmatprep.subr.mxu0 0.0
    %82 = vmatpush1.msra.mxu0 0.0
    %83 = vmatprep.subr.mxu0 0.0
    %84 = vmatpush1.msra.mxu0 0.0
    %85 = vmatprep.subr.mxu0 0.0
    %86 = vmatpush1.msra.mxu0 0.0
    %87 = vmatprep.subr.mxu0 0.0
    %88 = vmatpush1.msra.mxu0 0.0
    %89 = vmatprep.subr.mxu0 0.0
    %90 = vmatpush1.msra.mxu0 0.0
    %91 = vmatprep.subr.mxu0 0.0
    %92 = vmatpush1.msra.mxu0 0.0
    %93 = vmatprep.mubr.f32.mxu0 0.0
    %94 = vmatmul.mubr.f32.gmra.mrb[0].mxu0 %v12
    %v95 = vpop.f32.mrb[0].mxu0
    %v96 = vadd.f32 0.0, %v95
    %v97 = vpop.f32.mrb[0].mxu0
    %98 = vdwg.mxu0
    %99 = vst [vmem:[#allocation2] sm:$0xff] %v96
    // Predicated region
    $region10: #{matmul.1} parent=1 // pred_check
      _
    $region11: #{matmul.1} parent=1 // pred_check_branch
      %101 = sbr.rel (0) target = $region13
    $region12: #{matmul.1} parent=1 // pred_region
      %s103 = ssub.s32 128, 128
      %104 = vsyncadd [#allocation3], %s103
      %s106 = sshll.u32 [#allocation2], 4
      %s107 = int_to_ptr.vmem [resolvable:$true] %s106
      %109 = dma.vmem_to_hbm [thread:$0]  %s107, 128, %s2, [#allocation3]
    $region13: #{matmul.1} parent=1 // pred_fallthru
      _
    // Predicated region
    $region14: #{matmul.1} parent=1 // pred_check
      _
    $region15: #{matmul.1} parent=1 // pred_check_branch
      %111 = sbr.rel (0) target = $region17
    $region16: #{matmul.1} parent=1 // pred_region
      %112 = dma.done [#allocation3], 128
    $region17: #{matmul.1} parent=1 // pred_fallthru
      _
    %113 = vsyncpa [#allocation3], 1

</llo_original>
